<compile_context>
chip_gen: v7x
topology: tpu7x:2x2x1
jax: 0.10.0
libtpu: 0.0.40
codegen_flags: <defaults>
</compile_context>

<pallas_src>
import functools

import jax
import jax.numpy as jnp
import numpy as np
from jax.experimental import pallas as pl
from jax.experimental.pallas import tpu as pltpu


# --------------------------------------------------------------------------
# Kernels
# --------------------------------------------------------------------------
def _multihot_kernel(idx_ref, table_t_ref, bias_ref, out_ref, *, mxu_dtype):
    # idx_ref     : (F, TB) int32      field-major indices, batch on lanes
    # table_t_ref : (D, V)  mxu_dtype  transposed embedding table (resident)
    # bias_ref    : (D, 1)  f32
    # out_ref     : (D, TB) f32        lane-dense output slab
    F, TB = idx_ref.shape
    D, V = table_t_ref.shape

    idx = idx_ref[...]                                         # (F, TB)
    viota = jax.lax.broadcasted_iota(jnp.int32, (V, TB), 0)    # vocab ids on sublanes

    # Integer accumulation of the per-field one-hot masks; a single float
    # convert at the end (avoids F separate int->float converts on the VALU).
    counts_i = (viota == idx[0:1, :]).astype(jnp.int32)
    for f in range(1, F):
        counts_i = counts_i + (viota == idx[f:f + 1, :]).astype(jnp.int32)
    counts = counts_i.astype(mxu_dtype)                        # (V, TB)

    # Single MXU matmul; f32 accumulation. Bias added once per tile.
    acc = jnp.dot(table_t_ref[...], counts,
                  preferred_element_type=jnp.float32)          # (D, TB)
    out_ref[...] = acc + bias_ref[...]


def _perfield_kernel(idx_ref, tables_ref, bias_ref, out_ref, *, offsets, mxu_dtype):
    # idx_ref    : (F, TB)      int32
    # tables_ref : (F, D, DMP)  mxu_dtype  per-field table slices, zero-padded rows
    # bias_ref   : (D, 1)       f32
    # out_ref    : (D, TB)      f32
    # Assumes x[:, f] lies in [offsets[f], offsets[f] + field_dims[f]).
    F, TB = idx_ref.shape
    _, D, DMP = tables_ref.shape

    idx = idx_ref[...]
    fiota = jax.lax.broadcasted_iota(jnp.int32, (DMP, TB), 0)  # local field ids

    def onehot(f):
        # Compare only against this field's (padded) sub-range: ~F x less VALU
        # work than F full-(V, TB) compares. Padded rows can't match in-range
        # indices and the corresponding table rows are zero anyway.
        return (fiota == (idx[f:f + 1, :] - offsets[f])).astype(mxu_dtype)

    acc = jnp.dot(tables_ref[0], onehot(0), preferred_element_type=jnp.float32)
    for f in range(1, F):
        acc = acc + jnp.dot(tables_ref[f], onehot(f),
                            preferred_element_type=jnp.float32)
    out_ref[...] = acc + bias_ref[...]


# --------------------------------------------------------------------------
# Capability probe: single-buffered resident blocks (pipeline_mode=Buffered(1))
# --------------------------------------------------------------------------
_SINGLE_BUFFER_OK = None


def _probe_kernel(x_ref, c_ref, o_ref):
    o_ref[...] = x_ref[...] + c_ref[...]


def _single_buffer_supported():
    """Probe once whether pipeline_mode=pl.Buffered(1) lowers on this install."""
    global _SINGLE_BUFFER_OK
    if _SINGLE_BUFFER_OK is None:
        try:
            fn = pl.pallas_call(
                _probe_kernel,
                out_shape=jax.ShapeDtypeStruct((8, 256), jnp.float32),
                grid=(2,),
                in_specs=[
                    pl.BlockSpec((8, 128), lambda i: (0, i)),
                    pl.BlockSpec((8, 128), lambda i: (0, 0),
                                 pipeline_mode=pl.Buffered(1)),
                ],
                out_specs=pl.BlockSpec((8, 128), lambda i: (0, i)),
            )
            jax.block_until_ready(fn(jnp.zeros((8, 256), jnp.float32),
                                     jnp.zeros((8, 128), jnp.float32)))
            _SINGLE_BUFFER_OK = True
        except Exception:  # any failure -> fall back to default double-buffering
            _SINGLE_BUFFER_OK = False
    return _SINGLE_BUFFER_OK


def _resident_block_spec(block_shape):
    """Constant-index (resident) block; single-buffered when supported so the
    resident table/bias don't pay 2x VMEM (matters under v7x's 64 MiB VMEM)."""
    ndim = len(block_shape)
    index_map = lambda i: (0,) * ndim
    if _single_buffer_supported():
        return pl.BlockSpec(block_shape, index_map, pipeline_mode=pl.Buffered(1))
    return pl.BlockSpec(block_shape, index_map)


# --------------------------------------------------------------------------
# Wrapper
# --------------------------------------------------------------------------
def _round_up(x, m):
    return ((x + m - 1) // m) * m


def _pick_batch_tile(b_pad, intermediate_rows, vmem_budget_bytes=8 << 20):
    """Largest 128-aligned batch tile whose counts/one-hot slab fits the VMEM
    budget, preferring >= 2 grid tiles so v7x's two TensorCores both get work."""
    for tb in (8192, 4096, 2048, 1024, 512, 256, 128):
        if intermediate_rows * tb * 4 > vmem_budget_bytes:
            continue
        if 2 * tb <= b_pad:
            return tb
    return 128


def features_linear(x_idx, table, bias, *, field_dims=None, batch_tile=None,
                    mxu_dtype=jnp.bfloat16):
    """FM first-order term: out[b] = sum_f table[x[b, f]] + bias, (B, D) f32.

    field_dims: optional static tuple. When given, assumes the standard FM
      convention x[:, f] in [offset_f, offset_f + field_dims[f]) and uses the
      cheaper per-field one-hot path. Leave None for arbitrary indices.
    mxu_dtype: dtype of the MXU operands (table + counts). Default bf16
      (halves table VMEM/HBM traffic, native MXU path on v6e/v7x, ~1e-3 rel
      deviation from f32); pass jnp.float32 for exact parity with torch.
    """
    B, F = x_idx.shape
    V, D = table.shape

    # ---- batch padding (to 128 lanes only) & tile selection ----------------
    b_pad = _round_up(max(B, 1), 128)
    if field_dims is not None:
        field_dims = tuple(int(d) for d in field_dims)
        if sum(field_dims) != V:
            raise ValueError("sum(field_dims) must equal table.shape[0]")
        if len(field_dims) != F:
            raise ValueError("len(field_dims) must equal x.shape[1]")
        dmp = _round_up(max(field_dims), 8)        # per-field one-hot height
        inter_rows = F * dmp                       # conservative live estimate
    else:
        dmp = None
        inter_rows = _round_up(V, 8)               # counts slab height

    tb = batch_tile if batch_tile is not None else _pick_batch_tile(b_pad, inter_rows)
    tb = max(128, (min(int(tb), b_pad) // 128) * 128)

    # ---- operand prep ------------------------------------------------------
    x32 = x_idx.astype(jnp.int32)
    if b_pad != B:
        x32 = jnp.pad(x32, ((0, b_pad - B), (0, 0)))     # pad rows use index 0
    idx_t = x32.T                                        # (F, b_pad) field-major
    bias2d = bias.astype(jnp.float32).reshape(D, 1)

    grid = (pl.cdiv(b_pad, tb),)
    idx_spec = pl.BlockSpec((F, tb), lambda i: (0, i))
    out_spec = pl.BlockSpec((D, tb), lambda i: (0, i))
    compiler_params = pltpu.CompilerParams(
        # Independent batch tiles -> v7x megacore can split them across TCs.
        dimension_semantics=("parallel",),
        # Let the x pad/convert/transpose producer fuse into the input DMA so
        # it is not a separate HBM read+write pass (effective under jit).
        allow_input_fusion=[0],
    )

    if field_dims is None:
        table_t = table.astype(mxu_dtype).T               # (D, V), resident
        kernel = functools.partial(_multihot_kernel, mxu_dtype=mxu_dtype)
        in_specs = [idx_spec,
                    _resident_block_spec((D, V)),
                    _resident_block_spec((D, 1))]
        operands = (idx_t, table_t, bias2d)
    else:
        offsets, off = [], 0
        for dim in field_dims:
            offsets.append(off)
            off += dim
        offsets = tuple(offsets)
        slabs = []
        for off_f, dim_f in zip(offsets, field_dims):
            sl = table[off_f:off_f + dim_f].astype(jnp.float32)   # (dim_f, D)
            sl = jnp.pad(sl, ((0, dmp - dim_f), (0, 0)))          # zero rows
            slabs.append(sl.T)                                    # (D, dmp)
        tables = jnp.stack(slabs, axis=0).astype(mxu_dtype)       # (F, D, dmp)
        kernel = functools.partial(_perfield_kernel, offsets=offsets,
                                   mxu_dtype=mxu_dtype)
        in_specs = [idx_spec,
                    _resident_block_spec((F, D, dmp)),
                    _resident_block_spec((D, 1))]
        operands = (idx_t, tables, bias2d)

    out_t = pl.pallas_call(
        kernel,
        out_shape=jax.ShapeDtypeStruct((D, b_pad), jnp.float32),
        grid=grid,
        in_specs=in_specs,
        out_specs=out_spec,
        compiler_params=compiler_params,
    )(*operands)

    out_t = out_t[:, :B]
    # D == 1 (common FM case): (1, B) -> (B, 1) is a pure reshape (no layout
    # copy); only D > 1 needs a real transpose back to (B, D).
    return out_t.reshape(B, D) if D == 1 else out_t.T


# --------------------------------------------------------------------------
# Demo / correctness checks
# --------------------------------------------------------------------------
if __name__ == "__main__":
    field_dims = (10, 12, 14)          # vocab = 36
    vocab = int(sum(field_dims))
    output_dim = 1
    num_fields = len(field_dims)

    key = jax.random.PRNGKey(0)
    k_tab, k1, k2, k3 = jax.random.split(key, 4)

    # torch.nn.Embedding default init ~ N(0, 1); bias = zeros.
    table = jax.random.normal(k_tab, (vocab, output_dim), dtype=jnp.float32)
    bias = jnp.zeros((output_dim,), dtype=jnp.float32)
    table_bf16 = table.astype(jnp.bfloat16).astype(jnp.float32)

    def reference(x, tab):
        return jnp.sum(tab[x], axis=1) + bias            # (B, D)

    # 1) Exact f32 MXU path, arbitrary indices, tiny batch (padded to 128).
    x1 = jax.random.randint(k1, (4, num_fields), 0, vocab, dtype=jnp.int32)
    out1 = jax.block_until_ready(
        features_linear(x1, table, bias, mxu_dtype=jnp.float32))
    assert out1.shape == (4, output_dim)
    np.testing.assert_allclose(np.asarray(out1), np.asarray(reference(x1, table)),
                               rtol=1e-5, atol=1e-5)

    # 2) Default bf16 MXU path; batch not a multiple of 128 (pad + cdiv grid).
    #    Compared against the bf16-quantized table (accumulation stays f32).
    x2 = jax.random.randint(k2, (300, num_fields), 0, vocab, dtype=jnp.int32)
    out2 = jax.block_until_ready(features_linear(x2, table, bias))
    assert out2.shape == (300, output_dim)
    np.testing.assert_allclose(np.asarray(out2),
                               np.asarray(reference(x2, table_bf16)),
                               rtol=1e-5, atol=1e-5)

    # 3) Per-field fast path: field-partitioned indices (standard FM layout),
    #    jitted wrapper, forced 128-row tiles -> multi-tile "parallel" grid.
    cols, off = [], 0
    keys3 = jax.random.split(k3, num_fields)
    for f, dim in enumerate(field_dims):
        cols.append(jax.random.randint(keys3[f], (256, 1), off, off + dim,
                                       dtype=jnp.int32))
        off += dim
    x3 = jnp.concatenate(cols, axis=1)
    fl_fielded = jax.jit(lambda x: features_linear(
        x, table, bias, field_dims=field_dims, batch_tile=128))
    out3 = jax.block_until_ready(fl_fielded(x3))
    assert out3.shape == (256, output_dim)
    np.testing.assert_allclose(np.asarray(out3),
                               np.asarray(reference(x3, table_bf16)),
                               rtol=1e-5, atol=1e-5)

    print("KERNEL_OK")
</pallas_src>

<mosaic_0001>
module attributes {stable_mosaic.version = 11 : i64} {
  func.func @_probe_kernel(%arg0: i32, %arg1: memref<8x128xf32, #tpu.memory_space<vmem>>, %arg2: memref<8x128xf32, #tpu.memory_space<vmem>>, %arg3: memref<8x128xf32, #tpu.memory_space<vmem>>) attributes {dimension_semantics = [#tpu.dimension_semantics<arbitrary>], iteration_bounds = array<i64: 2>, scalar_prefetch = 0 : i64, scratch_operands = 0 : i64, tpu.core_type = #tpu.core_type<tc>, window_params = [{transform_indices = @transform_0, window_bounds = array<i64: 8, 128>}, {pipeline_mode = #tpu.pipeline_mode<synchronous>, transform_indices = @transform_1, window_bounds = array<i64: 8, 128>}, {transform_indices = @transform_2, window_bounds = array<i64: 8, 128>}]} {
    %c0 = arith.constant 0 : index
    %c0_0 = arith.constant 0 : index
    %0 = vector.load %arg1[%c0, %c0_0] : memref<8x128xf32, #tpu.memory_space<vmem>>, vector<8x128xf32>
    %c0_1 = arith.constant 0 : index
    %c0_2 = arith.constant 0 : index
    %1 = vector.load %arg2[%c0_1, %c0_2] : memref<8x128xf32, #tpu.memory_space<vmem>>, vector<8x128xf32>
    %2 = arith.addf %0, %1 : vector<8x128xf32>
    %c0_3 = arith.constant 0 : index
    %c0_4 = arith.constant 0 : index
    %3 = vector.load %arg3[%c0_3, %c0_4] : memref<8x128xf32, #tpu.memory_space<vmem>>, vector<8x128xf32>
    tpu.vector_store %arg3[%c0_3, %c0_4], %2 {strides = array<i32>} : memref<8x128xf32, #tpu.memory_space<vmem>>, vector<8x128xf32>,
    return
  }
  func.func @transform_0(%arg0: i32) -> (i32, i32) {
    %c0_i32 = arith.constant 0 : i32
    %c0_i32_0 = arith.constant 0 : i32
    return %c0_i32, %arg0 : i32, i32
  }
  func.func @transform_1(%arg0: i32) -> (i32, i32) {
    %c0_i32 = arith.constant 0 : i32
    %c0_i32_0 = arith.constant 0 : i32
    %c0_i32_1 = arith.constant 0 : i32
    return %c0_i32, %c0_i32_0 : i32, i32
  }
  func.func @transform_2(%arg0: i32) -> (i32, i32) {
    %c0_i32 = arith.constant 0 : i32
    %c0_i32_0 = arith.constant 0 : i32
    return %c0_i32, %arg0 : i32, i32
  }
}

module attributes {stable_mosaic.version = 11 : i64} {
  func.func @_multihot_kernel(%arg0: i32, %arg1: memref<3x128xi32, #tpu.memory_space<vmem>>, %arg2: memref<1x36xf32, #tpu.memory_space<vmem>>, %arg3: memref<1x1xf32, #tpu.memory_space<vmem>>, %arg4: memref<1x128xf32, #tpu.memory_space<vmem>>) attributes {dimension_semantics = [#tpu.dimension_semantics<parallel>], iteration_bounds = array<i64: 1>, scalar_prefetch = 0 : i64, scratch_operands = 0 : i64, tpu.core_type = #tpu.core_type<tc>, window_params = [{transform_indices = @transform_0, window_bounds = array<i64: 3, 128>}, {pipeline_mode = #tpu.pipeline_mode<synchronous>, transform_indices = @transform_1, window_bounds = array<i64: 1, 36>}, {pipeline_mode = #tpu.pipeline_mode<synchronous>, transform_indices = @transform_2, window_bounds = array<i64: 1, 1>}, {transform_indices = @transform_3, window_bounds = array<i64: 1, 128>}]} {
    %c0 = arith.constant 0 : index
    %c0_0 = arith.constant 0 : index
    %0 = vector.load %arg1[%c0, %c0_0] : memref<3x128xi32, #tpu.memory_space<vmem>>, vector<3x128xi32>
    %1 = tpu.iota {dimensions = array<i32: 0>} : vector<36x128xi32>
    %2 = vector.extract_strided_slice %0 {offsets = [0, 0], sizes = [1, 128], strides = [1, 1]} : vector<3x128xi32> to vector<1x128xi32>
    %3 = vector.broadcast %2 : vector<1x128xi32> to vector<36x128xi32>
    %4 = arith.cmpi eq, %1, %3 : vector<36x128xi32>
    %5 = arith.extui %4 : vector<36x128xi1> to vector<36x128xi32>
    %6 = vector.extract_strided_slice %0 {offsets = [1, 0], sizes = [1, 128], strides = [1, 1]} : vector<3x128xi32> to vector<1x128xi32>
    %7 = vector.broadcast %6 : vector<1x128xi32> to vector<36x128xi32>
    %8 = arith.cmpi eq, %1, %7 : vector<36x128xi32>
    %9 = arith.extui %8 : vector<36x128xi1> to vector<36x128xi32>
    %10 = arith.addi %5, %9 : vector<36x128xi32>
    %11 = vector.extract_strided_slice %0 {offsets = [2, 0], sizes = [1, 128], strides = [1, 1]} : vector<3x128xi32> to vector<1x128xi32>
    %12 = vector.broadcast %11 : vector<1x128xi32> to vector<36x128xi32>
    %13 = arith.cmpi eq, %1, %12 : vector<36x128xi32>
    %14 = arith.extui %13 : vector<36x128xi1> to vector<36x128xi32>
    %15 = arith.addi %10, %14 : vector<36x128xi32>
    %16 = arith.sitofp %15 : vector<36x128xi32> to vector<36x128xf32>
    %c0_1 = arith.constant 0 : index
    %c0_2 = arith.constant 0 : index
    %17 = vector.load %arg2[%c0_1, %c0_2] : memref<1x36xf32, #tpu.memory_space<vmem>>, vector<1x36xf32>
    %cst = arith.constant dense<0.000000e+00> : vector<1x128xf32>
    %18 = tpu.matmul %17, %16, %cst {dimension_numbers = #tpu.dot_dimension_numbers<[1], [0], [0], [1], [0, 0, 1, 1], [], []>} : vector<1x36xf32>, vector<36x128xf32>, vector<1x128xf32> -> vector<1x128xf32>
    %c0_3 = arith.constant 0 : index
    %c0_4 = arith.constant 0 : index
    %19 = vector.load %arg3[%c0_3, %c0_4] : memref<1x1xf32, #tpu.memory_space<vmem>>, vector<1x1xf32>
    %20 = vector.broadcast %19 : vector<1x1xf32> to vector<1x128xf32>
    %21 = arith.addf %18, %20 : vector<1x128xf32>
    %c0_5 = arith.constant 0 : index
    %c0_6 = arith.constant 0 : index
    %22 = vector.load %arg4[%c0_5, %c0_6] : memref<1x128xf32, #tpu.memory_space<vmem>>, vector<1x128xf32>
    tpu.vector_store %arg4[%c0_5, %c0_6], %21 {strides = array<i32>} : memref<1x128xf32, #tpu.memory_space<vmem>>, vector<1x128xf32>,
    return
  }
  func.func @transform_0(%arg0: i32) -> (i32, i32) {
    %c0_i32 = arith.constant 0 : i32
    %c0_i32_0 = arith.constant 0 : i32
    return %c0_i32, %arg0 : i32, i32
  }
  func.func @transform_1(%arg0: i32) -> (i32, i32) {
    %c0_i32 = arith.constant 0 : i32
    %c0_i32_0 = arith.constant 0 : i32
    %c0_i32_1 = arith.constant 0 : i32
    return %c0_i32, %c0_i32_0 : i32, i32
  }
  func.func @transform_2(%arg0: i32) -> (i32, i32) {
    %c0_i32 = arith.constant 0 : i32
    %c0_i32_0 = arith.constant 0 : i32
    %c0_i32_1 = arith.constant 0 : i32
    return %c0_i32, %c0_i32_0 : i32, i32
  }
  func.func @transform_3(%arg0: i32) -> (i32, i32) {
    %c0_i32 = arith.constant 0 : i32
    %c0_i32_0 = arith.constant 0 : i32
    return %c0_i32, %arg0 : i32, i32
  }
}

</mosaic_0001>

<llo_original>
// kernel: tpu_custom_call.1
$region0: #{tpu_custom_call.1}
  #allocation0 [shape = 'u32[]', space=smem, size = 0x4, offset = 0x4, fixed_abs, tag = 'smem constant byte address 0x4 - core index']
  #allocation1 [shape = 'u32[144,128]{1,0:T(1,128)}', space=vmem, size = 0x12000, scoped, tag = 'internal scratch']
  %s0 = inlined_call_operand.hbm [shape: f32[8,256], index: 0, kind: input, shape index: {}]
  %s1 = inlined_call_operand.hbm [shape: f32[8,128], index: 1, kind: input, shape index: {}]
  %s2 = inlined_call_operand.hbm [shape: f32[8,256], index: 2, kind: output, shape index: {}]
  %s3 = sld [smem:[#allocation0]]
  $region49: #{tpu_custom_call.1} parent=0
    _
  %s5 = ssub.s32 1, %s3
  %s6 = scalar_select 0, %s5, %s3
  $region1: #{tpu_custom_call.1} parent=0
    #allocation2 [shape = 'u8[8192]{0}', space=vmem, size = 0x2000, scoped, tag = 'input window, operand 0']
    #allocation3 [shape = 's32[2]{0}', space=sflag, size = 0x8, scoped, tag = 'scoped memory for tpu_custom_call.1']
    #allocation4 [shape = 's32[2]{0}', space=sflag, size = 0x8, scoped, tag = 'scoped memory for tpu_custom_call.1']
    #allocation5 [shape = 'u8[4096]{0}', space=vmem, size = 0x1000, scoped, tag = 'input window, operand 1, single buffered']
    #allocation6 [shape = 's32[1]{0}', space=sflag, size = 0x4, scoped, tag = 'scoped memory for tpu_custom_call.1']
    #allocation7 [shape = 'u8[8192]{0}', space=vmem, size = 0x2000, scoped, tag = 'output window, operand 0']
    %7 = vsyncpa [#allocation3], 0
    %s8 = scalar_lea.sflag [#allocation3], 1
    %9 = vsyncpa %s8, 0
    %10 = vsyncpa [#allocation6], 0
    %11 = vsyncpa [#allocation4], 0
    %s12 = scalar_lea.sflag [#allocation4], 1
    %13 = vsyncpa %s12, 0
    loop: start=0, step=1, limit=4
    $region2: #{tpu_custom_call.1} parent=1 // loop_pre_header
      _
    $region3: #{tpu_custom_call.1} parent=1 // loop_header
      %s15 = sphi 0, %s19
      %p16 = scmp.ge.s32.totalorder %s15, 4
      %s25 = sphi 0, %s27
      %s28 = sphi 0, %s25
      %s29 = sphi 0, %s28
      %s45 = sphi 0, %s29
      %s49 = sphi 0, %s49
      %s51 = sphi 0, %s49
      %s52 = sphi 0, %s51
      %s66 = sphi 0, %s52
      %s72 = sphi 0, %s74
      %s75 = sphi 0, %s72
      %s76 = sphi 0, %s75
      %s92 = sphi 0, %s76
    $region4: #{tpu_custom_call.1} parent=1 // loop_header_branch
      %18 = sbr.rel (%p16) target = $region8
    $region5: #{tpu_custom_call.1} parent=1 // loop_body
      %s20 = ssub.s32 %s15, 1
      %s21 = ssub.s32 %s15, 2
      %s22 = sadd.s32 %s15, 1
      %s23 = ssub.s32 %s15, %s22
      %p24 = scmp.eq.s32.totalorder %s23, 0
      %s26 = sadd.s32 %s25, 1
      %s27 = scalar_select %p24, %s25, %s26
      %p30 = pneg %p24
      %p31 = scmp.eq.s32.totalorder %s15, 1
      %p32 = por %p30, %p31
      %p33 = scmp.ne.s32.totalorder %s25, %s28
      %p34 = scmp.eq.s32.totalorder %s15, 0
      %p35 = por %p33, %p34
      %p36 = scmp.ne.s32.totalorder %s25, %s28
      %p37 = scmp.eq.s32.totalorder %s20, 1
      %p38 = por %p36, %p37
      %p39 = scmp.ne.s32.totalorder %s28, %s29
      %p40 = scmp.eq.s32.totalorder %s20, 0
      %p41 = por %p39, %p40
      %p42 = scmp.ne.s32.totalorder %s28, %s29
      %p43 = scmp.eq.s32.totalorder %s21, 1
      %p44 = por %p42, %p43
      %p46 = scmp.ne.s32.totalorder %s29, %s45
      %p47 = scmp.eq.s32.totalorder %s21, 0
      %p48 = por %p46, %p47
      %s50 = sadd.s32 %s49, 1
      %p53 = scmp.eq.s32.totalorder %s15, 1
      %p54 = scmp.ne.s32.totalorder %s49, %s51
      %p55 = scmp.eq.s32.totalorder %s15, 0
      %p56 = por %p54, %p55
      %p57 = scmp.ne.s32.totalorder %s49, %s51
      %p58 = scmp.eq.s32.totalorder %s20, 1
      %p59 = por %p57, %p58
      %p60 = scmp.ne.s32.totalorder %s51, %s52
      %p61 = scmp.eq.s32.totalorder %s20, 0
      %p62 = por %p60, %p61
      %p63 = scmp.ne.s32.totalorder %s51, %s52
      %p64 = scmp.eq.s32.totalorder %s21, 1
      %p65 = por %p63, %p64
      %p67 = scmp.ne.s32.totalorder %s52, %s66
      %p68 = scmp.eq.s32.totalorder %s21, 0
      %p69 = por %p67, %p68
      %s70 = ssub.s32 %s15, %s22
      %p71 = scmp.eq.s32.totalorder %s70, 0
      %s73 = sadd.s32 %s72, 1
      %s74 = scalar_select %p71, %s72, %s73
      %p77 = pneg %p71
      %p78 = scmp.eq.s32.totalorder %s15, 1
      %p79 = por %p77, %p78
      %p80 = scmp.ne.s32.totalorder %s72, %s75
      %p81 = scmp.eq.s32.totalorder %s15, 0
      %p82 = por %p80, %p81
      %p83 = scmp.ne.s32.totalorder %s72, %s75
      %p84 = scmp.eq.s32.totalorder %s20, 1
      %p85 = por %p83, %p84
      %p86 = scmp.ne.s32.totalorder %s75, %s76
      %p87 = scmp.eq.s32.totalorder %s20, 0
      %p88 = por %p86, %p87
      %p89 = scmp.ne.s32.totalorder %s75, %s76
      %p90 = scmp.eq.s32.totalorder %s21, 1
      %p91 = por %p89, %p90
      %p93 = scmp.ne.s32.totalorder %s76, %s92
      %p94 = scmp.eq.s32.totalorder %s21, 0
      %p95 = por %p93, %p94
      %p96 = scmp.le.s32.totalorder 1, %s15
      %p97 = scmp.lt.s32.totalorder %s15, 3
      %p98 = pnand %p96, %p97
      %p99 = pneg %p98
      // Predicated region
      $region9: #{tpu_custom_call.1} parent=5 // pred_check
        _
      $region10: #{tpu_custom_call.1} parent=5 // pred_check_branch
        %101 = sbr.rel (%p98) target = $region12
      $region11: #{tpu_custom_call.1} parent=5 // pred_region
        %s102 = ssub.s32 %s15, 1
        // Predicated region
        $region13: #{tpu_custom_call.1} parent=11 // pred_check
          %p103 = pneg %p62
        $region14: #{tpu_custom_call.1} parent=11 // pred_check_branch
          %105 = sbr.rel (%p103) target = $region16
        $region15: #{tpu_custom_call.1} parent=11 // pred_region
          %s107 = ssub.s32 128, 128
          %108 = vsyncadd [#allocation6], %s107
          %s110 = sshll.u32 [#allocation5], 4
          %s111 = int_to_ptr.vmem [resolvable:$true] %s110
          %113 = dma.hbm_to_vmem [thread:$0]  %s1, 128, %s111, [#allocation6]
        $region16: #{tpu_custom_call.1} parent=11 // pred_fallthru
          _
      $region12: #{tpu_custom_call.1} parent=5 // pred_fallthru
        _
      %p114 = scmp.lt.s32.totalorder %s15, 2
      // Predicated region
      $region17: #{tpu_custom_call.1} parent=5 // pred_check
        %p115 = pneg %p114
      $region18: #{tpu_custom_call.1} parent=5 // pred_check_branch
        %117 = sbr.rel (%p115) target = $region20
      $region19: #{tpu_custom_call.1} parent=5 // pred_region
        // Predicated region
        $region21: #{tpu_custom_call.1} parent=19 // pred_check
          %p118 = pneg %p35
        $region22: #{tpu_custom_call.1} parent=19 // pred_check_branch
          %120 = sbr.rel (%p118) target = $region24
        $region23: #{tpu_custom_call.1} parent=19 // pred_region
          %s121 = sand.u32 %s25, 1
          %s122 = scalar_lea.sflag [#allocation3], %s121
          %s123 = sand.u32 %s25, 1
          %s124 = smul.addr %s123, 8
          %s125 = scalar_lea.vmem [#allocation2], %s124
          %s127 = ssub.s32 128, 128
          %128 = vsyncadd %s122, %s127
          %s129 = smul.addr %s15, 128
          %s130 = scalar_lea.hbm %s0, %s129
          %s132 = sshll.u32 %s125, 4
          %s133 = int_to_ptr.vmem [resolvable:$true] %s132
          %135 = dma.hbm_to_vmem [thread:$0]  %s130, 128, %s133, %s122
        $region24: #{tpu_custom_call.1} parent=19 // pred_fallthru
          _
      $region20: #{tpu_custom_call.1} parent=5 // pred_fallthru
        _
      %p136 = scmp.le.s32.totalorder 1, %s15
      %p137 = scmp.lt.s32.totalorder %s15, 3
      %p138 = pnand %p136, %p137
      %p139 = pneg %p138
      // Predicated region
      $region25: #{tpu_custom_call.1} parent=5 // pred_check
        _
      $region26: #{tpu_custom_call.1} parent=5 // pred_check_branch
        %141 = sbr.rel (%p138) target = $region28
      $region27: #{tpu_custom_call.1} parent=5 // pred_region
        %s142 = ssub.s32 %s15, 1
        %s143 = sand.u32 %s28, 1
        %s144 = scalar_lea.sflag [#allocation3], %s143
        %s145 = sand.u32 %s28, 1
        %s146 = smul.addr %s145, 8
        %s147 = scalar_lea.vmem [#allocation2], %s146
        // Predicated region
        $region29: #{tpu_custom_call.1} parent=27 // pred_check
          %p148 = pneg %p41
        $region30: #{tpu_custom_call.1} parent=27 // pred_check_branch
          %150 = sbr.rel (%p148) target = $region32
        $region31: #{tpu_custom_call.1} parent=27 // pred_region
          %151 = dma.done %s144, 128
        $region32: #{tpu_custom_call.1} parent=27 // pred_fallthru
          _
        // Predicated region
        $region33: #{tpu_custom_call.1} parent=27 // pred_check
          %p152 = pneg %p62
        $region34: #{tpu_custom_call.1} parent=27 // pred_check_branch
          %154 = sbr.rel (%p152) target = $region36
        $region35: #{tpu_custom_call.1} parent=27 // pred_region
          %155 = dma.done [#allocation6], 128
        $region36: #{tpu_custom_call.1} parent=27 // pred_fallthru
          _
        %s156 = sand.u32 %s28, 1
        %s157 = scalar_lea.sflag [#allocation3], %s156
        %s158 = sand.u32 %s28, 1
        %s159 = smul.addr %s158, 8
        %s160 = scalar_lea.vmem [#allocation2], %s159
        %p161 = pneg %p41
        %p162 = pneg %p38
        %p163 = pneg %p62
        %p164 = pneg %p59
        %p165 = pneg %p88
        %p166 = pneg %p85
        %s167 = sand.u32 %s75, 1
        %s168 = scalar_lea.sflag [#allocation4], %s167
        %s169 = sand.u32 %s75, 1
        %s170 = smul.addr %s169, 8
        %s171 = scalar_lea.vmem [#allocation7], %s170
        %v172 = vld [vmem:[%s147] sm:$0xff]
        %v173 = vld [vmem:[#allocation5] sm:$0xff]
        %v174 = vadd.f32 %v172, %v173
        %175 = vst [vmem:[%s171] sm:$0xff] %v174
        %s176 = sand.u32 %s75, 1
        %s177 = scalar_lea.sflag [#allocation4], %s176
        %s178 = sand.u32 %s75, 1
        %s179 = smul.addr %s178, 8
        %s180 = scalar_lea.vmem [#allocation7], %s179
        // Predicated region
        $region37: #{tpu_custom_call.1} parent=27 // pred_check
          %p181 = pneg %p85
        $region38: #{tpu_custom_call.1} parent=27 // pred_check_branch
          %183 = sbr.rel (%p181) target = $region40
        $region39: #{tpu_custom_call.1} parent=27 // pred_region
          %s185 = ssub.s32 128, 128
          %186 = vsyncadd %s177, %s185
          %s187 = smul.addr %s20, 128
          %s188 = scalar_lea.hbm %s2, %s187
          %s190 = sshll.u32 %s180, 4
          %s191 = int_to_ptr.vmem [resolvable:$true] %s190
          %193 = dma.vmem_to_hbm [thread:$0]  %s191, 128, %s188, %s177
        $region40: #{tpu_custom_call.1} parent=27 // pred_fallthru
          _
      $region28: #{tpu_custom_call.1} parent=5 // pred_fallthru
        _
      %p194 = scmp.le.s32.totalorder 2, %s15
      // Predicated region
      $region41: #{tpu_custom_call.1} parent=5 // pred_check
        %p195 = pneg %p194
      $region42: #{tpu_custom_call.1} parent=5 // pred_check_branch
        %197 = sbr.rel (%p195) target = $region44
      $region43: #{tpu_custom_call.1} parent=5 // pred_region
        %s198 = ssub.s32 %s15, 2
        // Predicated region
        $region45: #{tpu_custom_call.1} parent=43 // pred_check
          %p199 = pneg %p91
        $region46: #{tpu_custom_call.1} parent=43 // pred_check_branch
          %201 = sbr.rel (%p199) target = $region48
        $region47: #{tpu_custom_call.1} parent=43 // pred_region
          %s202 = sand.u32 %s76, 1
          %s203 = scalar_lea.sflag [#allocation4], %s202
          %s204 = sand.u32 %s76, 1
          %s205 = smul.addr %s204, 8
          %s206 = scalar_lea.vmem [#allocation7], %s205
          %207 = dma.done %s203, 128
        $region48: #{tpu_custom_call.1} parent=43 // pred_fallthru
          _
      $region44: #{tpu_custom_call.1} parent=5 // pred_fallthru
        _
    $region6: #{tpu_custom_call.1} parent=1 // loop_footer
      %s19 = sadd.s32 1, %s15
    $region7: #{tpu_custom_call.1} parent=1 // loop_footer_branch
      %14 = sbr.rel target = $region3
    $region8: #{tpu_custom_call.1} parent=1 // loop_exit
      _
    %208 = vsyncpa [#allocation3], 1
    %s209 = scalar_lea.sflag [#allocation3], 1
    %210 = vsyncpa %s209, 1
    %211 = vsyncpa [#allocation6], 1
    %212 = vsyncpa [#allocation4], 1
    %s213 = scalar_lea.sflag [#allocation4], 1
    %214 = vsyncpa %s213, 1

// kernel: tpu_custom_call.1
$region0: #{tpu_custom_call.1}
  #allocation0 [shape = 'u32[]', space=smem, size = 0x4, offset = 0x4, fixed_abs, tag = 'smem constant byte address 0x4 - core index']
  #allocation1 [shape = 'u32[144,128]{1,0:T(1,128)}', space=vmem, size = 0x12000, scoped, tag = 'internal scratch']
  #allocation2 [shape = 'f32[1,1]{1,0:T(1,128)S(1)}', space=vmem, size = 0x200, scoped, tag = 'scoped memory for tpu_custom_call.1']
  %s0 = inlined_call_operand.hbm [shape: s32[3,128], index: 0, kind: input, shape index: {}]
  %s1 = inlined_call_operand.vmem [shape: f32[1,36], index: 1, kind: input, shape index: {}]
  %s2 = inlined_call_operand.<no memory space> [shape: f32[1,1], index: 2, kind: input, shape index: {}]
  %s3 = inlined_call_operand.hbm [shape: f32[1,128], index: 3, kind: output, shape index: {}]
  %s4 = sld [smem:[#allocation0]]
  $region26: #{tpu_custom_call.1} parent=0
    _
  %s6 = ssub.s32 1, %s4
  %s7 = scalar_select 0, %s6, %s4
  %v8 = vstv %s2
  %9 = vst [vmem:[#allocation2] sm:$0x1] %v8
  $region1: #{tpu_custom_call.1} parent=0
    #allocation3 [shape = 'u8[2048]{0}', space=vmem, size = 0x800, scoped, tag = 'input window, operand 0, single buffered']
    #allocation4 [shape = 's32[1]{0}', space=sflag, size = 0x4, scoped, tag = 'scoped memory for tpu_custom_call.1']
    #allocation5 [shape = 's32[1]{0}', space=sflag, size = 0x4, scoped, tag = 'scoped memory for tpu_custom_call.1']
    #allocation6 [shape = 'u8[512]{0}', space=vmem, size = 0x400, scoped, tag = 'output window, operand 0, single buffered']
    %10 = vsyncpa [#allocation4], 0
    %11 = vsyncpa [#allocation5], 0
    // Predicated region
    $region2: #{tpu_custom_call.1} parent=1 // pred_check
      _
    $region3: #{tpu_custom_call.1} parent=1 // pred_check_branch
      %13 = sbr.rel (0) target = $region5
    $region4: #{tpu_custom_call.1} parent=1 // pred_region
      %s15 = ssub.s32 64, 64
      %16 = vsyncadd [#allocation4], %s15
      %s18 = sshll.u32 [#allocation3], 4
      %s19 = int_to_ptr.vmem [resolvable:$true] %s18
      %21 = dma.hbm_to_vmem [thread:$0]  %s0, 64, %s19, [#allocation4]
    $region5: #{tpu_custom_call.1} parent=1 // pred_fallthru
      _
    // Predicated region
    $region6: #{tpu_custom_call.1} parent=1 // pred_check
      _
    $region7: #{tpu_custom_call.1} parent=1 // pred_check_branch
      %23 = sbr.rel (0) target = $region9
    $region8: #{tpu_custom_call.1} parent=1 // pred_region
      _
    $region9: #{tpu_custom_call.1} parent=1 // pred_fallthru
      _
    // Predicated region
    $region10: #{tpu_custom_call.1} parent=1 // pred_check
      _
    $region11: #{tpu_custom_call.1} parent=1 // pred_check_branch
      %25 = sbr.rel (0) target = $region13
    $region12: #{tpu_custom_call.1} parent=1 // pred_region
      _
    $region13: #{tpu_custom_call.1} parent=1 // pred_fallthru
      _
    // Predicated region
    $region14: #{tpu_custom_call.1} parent=1 // pred_check
      _
    $region15: #{tpu_custom_call.1} parent=1 // pred_check_branch
      %27 = sbr.rel (0) target = $region17
    $region16: #{tpu_custom_call.1} parent=1 // pred_region
      %28 = dma.done [#allocation4], 64
    $region17: #{tpu_custom_call.1} parent=1 // pred_fallthru
      _
    %v29 = vld [vmem:[#allocation3] sm:$0x7]
    %v30 = vlaneseq
    %v31 = vshrl.u32 %v30, 7
    %v32 = vadd.s32 %v31, 8
    %v33 = vadd.s32 %v31, 16
    %v34 = vadd.s32 %v31, 24
    %v35 = vadd.s32 %v31, 32
    %v36 = vlaneseq
    %v37 = vshrl.u32 %v36, 7
    %v38 = vsub.s32 0, %v37
    %v39 = vrot.slane %v29, %v38
    %vm40 = vcmp.eq.s32.totalorder %v31, %v39
    %vm41 = vcmp.eq.s32.totalorder %v32, %v39
    %vm42 = vcmp.eq.s32.totalorder %v33, %v39
    %vm43 = vcmp.eq.s32.totalorder %v34, %v39
    %vm44 = vcmp.eq.s32.totalorder %v35, %v39
    %v45 = vsel %vm40, 1, 0
    %v46 = vsel %vm41, 1, 0
    %v47 = vsel %vm42, 1, 0
    %v48 = vsel %vm43, 1, 0
    %v49 = vsel %vm44, 1, 0
    %v50 = vlaneseq
    %v51 = vshrl.u32 %v50, 7
    %v52 = vsub.s32 1, %v51
    %v53 = vrot.slane %v29, %v52
    %vm54 = vcmp.eq.s32.totalorder %v31, %v53
    %vm55 = vcmp.eq.s32.totalorder %v32, %v53
    %vm56 = vcmp.eq.s32.totalorder %v33, %v53
    %vm57 = vcmp.eq.s32.totalorder %v34, %v53
    %vm58 = vcmp.eq.s32.totalorder %v35, %v53
    %v59 = vsel %vm54, 1, 0
    %v60 = vsel %vm55, 1, 0
    %v61 = vsel %vm56, 1, 0
    %v62 = vsel %vm57, 1, 0
    %v63 = vsel %vm58, 1, 0
    %v64 = vadd.s32 %v45, %v59
    %v65 = vadd.s32 %v46, %v60
    %v66 = vadd.s32 %v47, %v61
    %v67 = vadd.s32 %v48, %v62
    %v68 = vadd.s32 %v49, %v63
    %v69 = vlaneseq
    %v70 = vshrl.u32 %v69, 7
    %v71 = vsub.s32 2, %v70
    %v72 = vrot.slane %v29, %v71
    %vm73 = vcmp.eq.s32.totalorder %v31, %v72
    %vm74 = vcmp.eq.s32.totalorder %v32, %v72
    %vm75 = vcmp.eq.s32.totalorder %v33, %v72
    %vm76 = vcmp.eq.s32.totalorder %v34, %v72
    %vm77 = vcmp.eq.s32.totalorder %v35, %v72
    %v78 = vsel %vm73, 1, 0
    %v79 = vsel %vm74, 1, 0
    %v80 = vsel %vm75, 1, 0
    %v81 = vsel %vm76, 1, 0
    %v82 = vsel %vm77, 1, 0
    %v83 = vadd.s32 %v64, %v78
    %v84 = vadd.s32 %v65, %v79
    %v85 = vadd.s32 %v66, %v80
    %v86 = vadd.s32 %v67, %v81
    %v87 = vadd.s32 %v68, %v82
    %v88 = vcvt.s32.f32 %v83
    %v89 = vcvt.s32.f32 %v84
    %v90 = vcvt.s32.f32 %v85
    %v91 = vcvt.s32.f32 %v86
    %v92 = vcvt.s32.f32 %v87
    %v93 = vld [vmem:[%s1] sm:$0x1]
    %v94 = vld [vmem:[#allocation2] sm:$0x1]
    %96 = vset.pattern.permute.xlu0 0
    %97 = vperm.xlu0 %96, %v94
    %v98 = vpop.permute.xlu0 %97
    %v100 = vlaneseq
    %v101 = vshrl.u32 %v100, 7
    %v102 = vsub.s32 0, %v101
    %v103 = vrot.slane %v98, %v102
    %vm104 = vcmask 293888
    %v106 = vsel %vm104, %v93, 0
    %vm108 = vcmask 1043456
    %v110 = vsel %vm108, %v92, 0
    %112 = vmatprep.subr.mxu0 0.0
    %113 = vmatpush1.msra.mxu0 %v88
    %114 = vmatprep.subr.mxu0 0.0
    %115 = vmatpush1.msra.mxu0 %v89
    %116 = vmatprep.subr.mxu0 0.0
    %117 = vmatpush1.msra.mxu0 %v90
    %118 = vmatprep.subr.mxu0 0.0
    %119 = vmatpush1.msra.mxu0 %v91
    %120 = vmatprep.subr.mxu0 0.0
    %121 = vmatpush1.msra.mxu0 %v110
    %122 = vmatprep.subr.mxu0 0.0
    %123 = vmatpush1.msra.mxu0 0.0
    %124 = vmatprep.subr.mxu0 0.0
    %125 = vmatpush1.msra.mxu0 0.0
    %126 = vmatprep.subr.mxu0 0.0
    %127 = vmatpush1.msra.mxu0 0.0
    %128 = vmatprep.subr.mxu0 0.0
    %129 = vmatpush1.msra.mxu0 0.0
    %130 = vmatprep.subr.mxu0 0.0
    %131 = vmatpush1.msra.mxu0 0.0
    %132 = vmatprep.subr.mxu0 0.0
    %133 = vmatpush1.msra.mxu0 0.0
    %134 = vmatprep.subr.mxu0 0.0
    %135 = vmatpush1.msra.mxu0 0.0
    %136 = vmatprep.subr.mxu0 0.0
    %137 = vmatpush1.msra.mxu0 0.0
    %138 = vmatprep.subr.mxu0 0.0
    %139 = vmatpush1.msra.mxu0 0.0
    %140 = vmatprep.subr.mxu0 0.0
    %141 = vmatpush1.msra.mxu0 0.0
    %142 = vmatprep.subr.mxu0 0.0
    %143 = vmatpush1.msra.mxu0 0.0
    %144 = vmatprep.subr.mxu0 0.0
    %145 = vmatpush1.msra.mxu0 0.0
    %146 = vmatprep.subr.mxu0 0.0
    %147 = vmatpush1.msra.mxu0 0.0
    %148 = vmatprep.subr.mxu0 0.0
    %149 = vmatpush1.msra.mxu0 0.0
    %150 = vmatprep.subr.mxu0 0.0
    %151 = vmatpush1.msra.mxu0 0.0
    %152 = vmatprep.subr.mxu0 0.0
    %153 = vmatpush1.msra.mxu0 0.0
    %154 = vmatprep.subr.mxu0 0.0
    %155 = vmatpush1.msra.mxu0 0.0
    %156 = vmatprep.subr.mxu0 0.0
    %157 = vmatpush1.msra.mxu0 0.0
    %158 = vmatprep.subr.mxu0 0.0
    %159 = vmatpush1.msra.mxu0 0.0
    %160 = vmatprep.subr.mxu0 0.0
    %161 = vmatpush1.msra.mxu0 0.0
    %162 = vmatprep.subr.mxu0 0.0
    %163 = vmatpush1.msra.mxu0 0.0
    %164 = vmatprep.subr.mxu0 0.0
    %165 = vmatpush1.msra.mxu0 0.0
    %166 = vmatprep.subr.mxu0 0.0
    %167 = vmatpush1.msra.mxu0 0.0
    %168 = vmatprep.subr.mxu0 0.0
    %169 = vmatpush1.msra.mxu0 0.0
    %170 = vmatprep.subr.mxu0 0.0
    %171 = vmatpush1.msra.mxu0 0.0
    %172 = vmatprep.subr.mxu0 0.0
    %173 = vmatpush1.msra.mxu0 0.0
    %174 = vmatprep.subr.mxu0 0.0
    %175 = vmatpush1.msra.mxu0 0.0
    %176 = vmatprep.mubr.f32.mxu0 0.0
    %177 = vmatmul.mubr.f32.gmra.mrb[0].mxu0 %v106
    %v178 = vpop.f32.mrb[0].mxu0
    %v179 = vadd.f32 %v103, %v178
    %v180 = vpop.f32.mrb[0].mxu0
    %181 = vdwg.mxu0
    %182 = vst [vmem:[#allocation6] sm:$0x1] %v179
    // Predicated region
    $region18: #{tpu_custom_call.1} parent=1 // pred_check
      _
    $region19: #{tpu_custom_call.1} parent=1 // pred_check_branch
      %184 = sbr.rel (0) target = $region21
    $region20: #{tpu_custom_call.1} parent=1 // pred_region
      %s186 = ssub.s32 16, 16
      %187 = vsyncadd [#allocation5], %s186
      %s189 = sshll.u32 [#allocation6], 4
      %s190 = int_to_ptr.vmem [resolvable:$true] %s189
      %192 = dma.vmem_to_hbm [thread:$0]  %s190, 16, %s3, [#allocation5]
    $region21: #{tpu_custom_call.1} parent=1 // pred_fallthru
      _
    // Predicated region
    $region22: #{tpu_custom_call.1} parent=1 // pred_check
      _
    $region23: #{tpu_custom_call.1} parent=1 // pred_check_branch
      %194 = sbr.rel (0) target = $region25
    $region24: #{tpu_custom_call.1} parent=1 // pred_region
      %195 = dma.done [#allocation5], 16
    $region25: #{tpu_custom_call.1} parent=1 // pred_fallthru
      _
    %196 = vsyncpa [#allocation4], 1
    %197 = vsyncpa [#allocation5], 1

</llo_original>
